<compile_context>
chip_gen: v7x
topology: tpu7x:2x2x1
jax: 0.10.0
libtpu: 0.0.40
codegen_flags: <defaults>
</compile_context>

<pallas_src>
import math

import jax
import jax.numpy as jnp
from jax.experimental import pallas as pl
from jax.experimental.pallas import tpu as pltpu

_VMEM_LIMIT_BYTES = 32 * 1024 * 1024  # in+out double-buffered 4 MiB tiles = 16 MiB


def _exp_envelope_kernel(d_ref, o_ref):
    # Upcast so the math stays f32 even for bf16 I/O (v5e has no bf16 VPU/EUP).
    d = d_ref[...].astype(jnp.float32)
    denom = (1.0 - d) * (1.0 + d)
    # One EUP pass (vrcp) instead of a multi-pass exact divide; two Newton
    # steps on the VPU recover full f32 accuracy essentially for free.
    r = pl.reciprocal(denom, approx=True)
    r = r * (2.0 - denom * r)
    r = r * (2.0 - denom * r)
    env = jnp.exp(-(d * d) * r)
    # d >= 1 (incl. d == 1, where the exponent is -inf/NaN) is masked to 0.
    o_ref[...] = jnp.where(d < 1.0, env, 0.0).astype(o_ref.dtype)


def _launch(slab: jax.Array, br: int, grid_rows: int) -> jax.Array:
    """Run the envelope kernel on a 2-D lane-dense slab (last dim % 128 == 0)."""
    rows, cols = slab.shape
    n_elem = rows * cols
    itemsize = jnp.dtype(slab.dtype).itemsize
    cost = pl.CostEstimate(
        flops=10 * n_elem,                     # VPU: sub/add/muls/Newton/cmp/select
        transcendentals=2 * n_elem,            # vrcp + exp per element
        bytes_accessed=2 * n_elem * itemsize,  # read + write (HBM-roofline bound)
    )
    return pl.pallas_call(
        _exp_envelope_kernel,
        out_shape=jax.ShapeDtypeStruct((rows, cols), slab.dtype),
        grid_spec=pltpu.PrefetchScalarGridSpec(
            num_scalar_prefetch=0,
            grid=(grid_rows,),
            in_specs=[pl.BlockSpec((br, cols), lambda i: (i, 0))],
            out_specs=pl.BlockSpec((br, cols), lambda i: (i, 0)),
        ),
        compiler_params=pltpu.CompilerParams(
            dimension_semantics=("parallel",),
            vmem_limit_bytes=_VMEM_LIMIT_BYTES,
        ),
        cost_estimate=cost,
    )(slab)


def _launch_flat(flat: jax.Array, block_rows: int, block_cols: int) -> jax.Array:
    """Envelope over a flat array whose length is a multiple of 128 (zero-copy)."""
    n = flat.shape[0]
    # Largest lane-dense width (power-of-two multiple of 128, <= block_cols)
    # dividing n, so the reshape below is a zero-copy bitcast.
    cols = 128
    for c in (block_cols, block_cols // 2, block_cols // 4, block_cols // 8):
        if c > 128 and c % 128 == 0 and n % c == 0:
            cols = c
            break
    rows = n // cols
    slab = flat.reshape(rows, cols)

    # Row-block sized so a tile holds ~block_rows*block_cols elements (~4 MiB f32).
    br = (block_rows * block_cols) // cols
    if br >= rows:
        br = rows  # full extent: always a legal block dim
    # else: br is a power-of-two multiple of 8 (legal); a partial last row
    # block is handled by Pallas masked stores.
    grid_rows = pl.cdiv(rows, br)
    return _launch(slab, br, grid_rows).reshape(-1)


def exponential_envelope(d_scaled: jax.Array,
                         *,
                         block_rows: int = 1024,
                         block_cols: int = 1024) -> jax.Array:
    """Elementwise exponential envelope (SpookyNet cutoff) via Pallas.

    Accepts any shape/dtype (f32 or bf16). Inputs whose total element count
    is a multiple of 128 are processed in a single HBM pass with zero extra
    copies; truly ragged inputs run the aligned prefix through the kernel and
    the (<128-element) tail through plain jnp.
    """
    orig_shape = d_scaled.shape
    dtype = d_scaled.dtype
    n = math.prod(orig_shape) if orig_shape else 1
    if n == 0:
        return jnp.zeros(orig_shape, dtype)

    flat = d_scaled.reshape(-1)
    n_main = (n // 128) * 128

    if n_main == n:
        return _launch_flat(flat, block_rows, block_cols).reshape(orig_shape)

    # Ragged: kernel on the aligned prefix, tiny (<128 element) tail in jnp.
    parts = []
    if n_main > 0:
        parts.append(_launch_flat(flat[:n_main], block_rows, block_cols))
    tail = flat[n_main:].astype(jnp.float32)
    tail_env = jnp.exp(-(tail * tail) / ((1.0 - tail) * (1.0 + tail)))
    parts.append(jnp.where(tail < 1.0, tail_env, 0.0).astype(dtype))
    out = parts[0] if len(parts) == 1 else jnp.concatenate(parts)
    return out.reshape(orig_shape)


def _reference(d_scaled: jax.Array) -> jax.Array:
    env = jnp.exp(-(d_scaled ** 2) / ((1.0 - d_scaled) * (1.0 + d_scaled)))
    return jnp.where(d_scaled < 1.0, env, jnp.zeros_like(d_scaled))


if __name__ == "__main__":
    key = jax.random.PRNGKey(0)
    k1, k2, k3, k4, k5 = jax.random.split(key, 5)

    # 1) 2-D input, total elements % 128 == 0 -> zero-copy lane-dense path.
    #    Values span [0, 1.2) so both branches (d < 1, d >= 1) are exercised.
    d_a = jax.random.uniform(k1, (16, 256), dtype=jnp.float32, minval=0.0, maxval=1.2)
    out_a = jax.block_until_ready(exponential_envelope(d_a))
    ref_a = _reference(d_a)
    assert out_a.shape == d_a.shape and out_a.dtype == d_a.dtype
    assert jnp.allclose(out_a, ref_a, atol=1e-6, rtol=1e-6), "aligned mismatch"

    # 2) Truly ragged input -> aligned prefix through the kernel + jnp tail.
    d_r = jax.random.uniform(k2, (2, 7, 33), dtype=jnp.float32, minval=0.0, maxval=1.2)
    out_r = jax.block_until_ready(exponential_envelope(d_r))
    ref_r = _reference(d_r)
    assert out_r.shape == d_r.shape and out_r.dtype == d_r.dtype
    assert jnp.allclose(out_r, ref_r, atol=1e-6, rtol=1e-6), "ragged mismatch"

    # 3) 1-D edge list (broadened fast-path predicate).
    d_e = jax.random.uniform(k3, (1024,), dtype=jnp.float32, minval=0.0, maxval=1.2)
    out_e = jax.block_until_ready(exponential_envelope(d_e))
    assert jnp.allclose(out_e, _reference(d_e), atol=1e-6, rtol=1e-6), "1-D mismatch"

    # 4) bf16 I/O (f32 math inside the kernel).
    d_b = jax.random.uniform(k4, (32, 256), dtype=jnp.float32, minval=0.0, maxval=1.2
                             ).astype(jnp.bfloat16)
    out_b = jax.block_until_ready(exponential_envelope(d_b))
    ref_b = _reference(d_b.astype(jnp.float32)).astype(jnp.bfloat16)
    assert out_b.dtype == jnp.bfloat16
    assert jnp.allclose(out_b.astype(jnp.float32), ref_b.astype(jnp.float32),
                        atol=2e-2), "bf16 mismatch"

    # 5) Multi-block grid with a partial last row block (small override tiles).
    d_p = jax.random.uniform(k5, (33, 128), dtype=jnp.float32, minval=0.0, maxval=1.2)
    out_p = jax.block_until_ready(
        exponential_envelope(d_p, block_rows=8, block_cols=128))
    assert jnp.allclose(out_p, _reference(d_p), atol=1e-6, rtol=1e-6), "partial-block mismatch"

    print("KERNEL_OK")
</pallas_src>

<mosaic_0001>
module attributes {stable_mosaic.version = 11 : i64} {
  func.func @_exp_envelope_kernel(%arg0: i32, %arg1: memref<4x1024xf32, #tpu.memory_space<vmem>>, %arg2: memref<4x1024xf32, #tpu.memory_space<vmem>>) attributes {dimension_semantics = [#tpu.dimension_semantics<parallel>], iteration_bounds = array<i64: 1>, scalar_prefetch = 0 : i64, scratch_operands = 0 : i64, tpu.core_type = #tpu.core_type<tc>, window_params = [{transform_indices = @transform_0, window_bounds = array<i64: 4, 1024>}, {transform_indices = @transform_1, window_bounds = array<i64: 4, 1024>}]} {
    %c0 = arith.constant 0 : index
    %c0_0 = arith.constant 0 : index
    %0 = vector.load %arg1[%c0, %c0_0] : memref<4x1024xf32, #tpu.memory_space<vmem>>, vector<4x1024xf32>
    %cst = arith.constant 1.000000e+00 : f32
    %1 = vector.broadcast %cst : f32 to vector<4x1024xf32>
    %2 = arith.subf %1, %0 : vector<4x1024xf32>
    %cst_1 = arith.constant 1.000000e+00 : f32
    %3 = vector.broadcast %cst_1 : f32 to vector<4x1024xf32>
    %4 = arith.addf %3, %0 : vector<4x1024xf32>
    %5 = arith.mulf %2, %4 : vector<4x1024xf32>
    %6 = tpu.reciprocal %5 {approx = true} : vector<4x1024xf32> -> vector<4x1024xf32>
    %7 = arith.mulf %5, %6 : vector<4x1024xf32>
    %cst_2 = arith.constant 2.000000e+00 : f32
    %8 = vector.broadcast %cst_2 : f32 to vector<4x1024xf32>
    %9 = arith.subf %8, %7 : vector<4x1024xf32>
    %10 = arith.mulf %6, %9 : vector<4x1024xf32>
    %11 = arith.mulf %5, %10 : vector<4x1024xf32>
    %cst_3 = arith.constant 2.000000e+00 : f32
    %12 = vector.broadcast %cst_3 : f32 to vector<4x1024xf32>
    %13 = arith.subf %12, %11 : vector<4x1024xf32>
    %14 = arith.mulf %10, %13 : vector<4x1024xf32>
    %15 = arith.mulf %0, %0 : vector<4x1024xf32>
    %cst_4 = arith.constant 0.000000e+00 : f32
    %16 = vector.broadcast %cst_4 : f32 to vector<4x1024xf32>
    %17 = arith.subf %16, %15 : vector<4x1024xf32>
    %18 = arith.mulf %17, %14 : vector<4x1024xf32>
    %19 = math.exp %18 : vector<4x1024xf32>
    %cst_5 = arith.constant 1.000000e+00 : f32
    %20 = vector.broadcast %cst_5 : f32 to vector<4x1024xf32>
    %21 = arith.cmpf olt, %0, %20 : vector<4x1024xf32>
    %cst_6 = arith.constant 0.000000e+00 : f32
    %22 = vector.broadcast %cst_6 : f32 to vector<4x1024xf32>
    %23 = arith.select %21, %19, %22 : vector<4x1024xi1>, vector<4x1024xf32>
    %c0_7 = arith.constant 0 : index
    %c0_8 = arith.constant 0 : index
    %24 = vector.load %arg2[%c0_7, %c0_8] : memref<4x1024xf32, #tpu.memory_space<vmem>>, vector<4x1024xf32>
    tpu.vector_store %arg2[%c0_7, %c0_8], %23 {strides = array<i32>} : memref<4x1024xf32, #tpu.memory_space<vmem>>, vector<4x1024xf32>,
    return
  }
  func.func @transform_0(%arg0: i32) -> (i32, i32) {
    %c0_i32 = arith.constant 0 : i32
    %c0_i32_0 = arith.constant 0 : i32
    return %arg0, %c0_i32 : i32, i32
  }
  func.func @transform_1(%arg0: i32) -> (i32, i32) {
    %c0_i32 = arith.constant 0 : i32
    %c0_i32_0 = arith.constant 0 : i32
    return %arg0, %c0_i32 : i32, i32
  }
}

</mosaic_0001>

<llo_original>
// kernel: tpu_custom_call.1
$region0: #{tpu_custom_call.1}
  #allocation0 [shape = 'u32[]', space=smem, size = 0x4, offset = 0x4, fixed_abs, tag = 'smem constant byte address 0x4 - core index']
  #allocation1 [shape = 'u32[144,128]{1,0:T(1,128)}', space=vmem, size = 0x12000, scoped, tag = 'internal scratch']
  %s0 = inlined_call_operand.hbm [shape: f32[4,1024], index: 0, kind: input, shape index: {}]
  %s1 = inlined_call_operand.hbm [shape: f32[4,1024], index: 1, kind: output, shape index: {}]
  %s2 = sld [smem:[#allocation0]]
  $region18: #{tpu_custom_call.1} parent=0
    _
  %s4 = ssub.s32 1, %s2
  %s5 = scalar_select 0, %s4, %s2
  $region1: #{tpu_custom_call.1} parent=0
    #allocation2 [shape = 'u8[16384]{0}', space=vmem, size = 0x4000, scoped, tag = 'input window, operand 0, single buffered']
    #allocation3 [shape = 's32[1]{0}', space=sflag, size = 0x4, scoped, tag = 'scoped memory for tpu_custom_call.1']
    #allocation4 [shape = 's32[1]{0}', space=sflag, size = 0x4, scoped, tag = 'scoped memory for tpu_custom_call.1']
    #allocation5 [shape = 'u8[16384]{0}', space=vmem, size = 0x4000, scoped, tag = 'output window, operand 0, single buffered']
    %6 = vsyncpa [#allocation3], 0
    %7 = vsyncpa [#allocation4], 0
    // Predicated region
    $region2: #{tpu_custom_call.1} parent=1 // pred_check
      _
    $region3: #{tpu_custom_call.1} parent=1 // pred_check_branch
      %9 = sbr.rel (0) target = $region5
    $region4: #{tpu_custom_call.1} parent=1 // pred_region
      %s11 = ssub.s32 512, 512
      %12 = vsyncadd [#allocation3], %s11
      %s14 = sshll.u32 [#allocation2], 4
      %s15 = int_to_ptr.vmem [resolvable:$true] %s14
      %17 = dma.hbm_to_vmem [thread:$0]  %s0, 512, %s15, [#allocation3]
    $region5: #{tpu_custom_call.1} parent=1 // pred_fallthru
      _
    // Predicated region
    $region6: #{tpu_custom_call.1} parent=1 // pred_check
      _
    $region7: #{tpu_custom_call.1} parent=1 // pred_check_branch
      %19 = sbr.rel (0) target = $region9
    $region8: #{tpu_custom_call.1} parent=1 // pred_region
      %20 = dma.done [#allocation3], 512
    $region9: #{tpu_custom_call.1} parent=1 // pred_fallthru
      _
    %v21 = vld [vmem:[#allocation2] sm:$0xff]
    %v22 = vld [vmem:[#allocation2 + $0x8] sm:$0xff]
    %v23 = vld [vmem:[#allocation2 + $0x10] sm:$0xff]
    %v24 = vld [vmem:[#allocation2 + $0x18] sm:$0xff]
    %v25 = vsub.f32 1.0, %v21
    %v26 = vsub.f32 1.0, %v22
    %v27 = vsub.f32 1.0, %v23
    %v28 = vsub.f32 1.0, %v24
    %v29 = vadd.f32 %v21, 1.0
    %v30 = vadd.f32 %v22, 1.0
    %v31 = vadd.f32 %v23, 1.0
    %v32 = vadd.f32 %v24, 1.0
    %v33 = vmul.f32 %v25, %v29
    %v34 = vmul.f32 %v26, %v30
    %v35 = vmul.f32 %v27, %v31
    %v36 = vmul.f32 %v28, %v32
    %v37 = vrcp.pop %v33
    %v38 = vrcp.pop %v34
    %v39 = vrcp.pop %v35
    %v40 = vrcp.pop %v36
    %v41 = vmul.f32 %v33, %v37
    %v42 = vmul.f32 %v34, %v38
    %v43 = vmul.f32 %v35, %v39
    %v44 = vmul.f32 %v36, %v40
    %v45 = vsub.f32 2.0, %v41
    %v46 = vsub.f32 2.0, %v42
    %v47 = vsub.f32 2.0, %v43
    %v48 = vsub.f32 2.0, %v44
    %v49 = vmul.f32 %v37, %v45
    %v50 = vmul.f32 %v38, %v46
    %v51 = vmul.f32 %v39, %v47
    %v52 = vmul.f32 %v40, %v48
    %v53 = vmul.f32 %v33, %v49
    %v54 = vmul.f32 %v34, %v50
    %v55 = vmul.f32 %v35, %v51
    %v56 = vmul.f32 %v36, %v52
    %v57 = vsub.f32 2.0, %v53
    %v58 = vsub.f32 2.0, %v54
    %v59 = vsub.f32 2.0, %v55
    %v60 = vsub.f32 2.0, %v56
    %v61 = vmul.f32 %v49, %v57
    %v62 = vmul.f32 %v50, %v58
    %v63 = vmul.f32 %v51, %v59
    %v64 = vmul.f32 %v52, %v60
    %v65 = vmul.f32 %v21, %v21
    %v66 = vmul.f32 %v22, %v22
    %v67 = vmul.f32 %v23, %v23
    %v68 = vmul.f32 %v24, %v24
    %v69 = vsub.f32 0.0, %v65
    %v70 = vsub.f32 0.0, %v66
    %v71 = vsub.f32 0.0, %v67
    %v72 = vsub.f32 0.0, %v68
    %v73 = vmul.f32 %v69, %v61
    %v74 = vmul.f32 %v70, %v62
    %v75 = vmul.f32 %v71, %v63
    %v76 = vmul.f32 %v72, %v64
    %v77 = vmul.f32 %v73, 1.442695
    %v78 = vpow.pop %v77
    %v79 = vmul.f32 %v74, 1.442695
    %v80 = vpow.pop %v79
    %v81 = vmul.f32 %v75, 1.442695
    %v82 = vpow.pop %v81
    %v83 = vmul.f32 %v76, 1.442695
    %v84 = vpow.pop %v83
    %vm85 = vcmp.lt.f32.partialorder %v21, 1.0
    %vm86 = vcmp.lt.f32.partialorder %v22, 1.0
    %vm87 = vcmp.lt.f32.partialorder %v23, 1.0
    %vm88 = vcmp.lt.f32.partialorder %v24, 1.0
    %v89 = vsel %vm85, %v78, 0.0
    %v90 = vsel %vm86, %v80, 0.0
    %v91 = vsel %vm87, %v82, 0.0
    %v92 = vsel %vm88, %v84, 0.0
    %93 = vst [vmem:[#allocation5] sm:$0xff] %v89
    %94 = vst [vmem:[#allocation5 + $0x8] sm:$0xff] %v90
    %95 = vst [vmem:[#allocation5 + $0x10] sm:$0xff] %v91
    %96 = vst [vmem:[#allocation5 + $0x18] sm:$0xff] %v92
    // Predicated region
    $region10: #{tpu_custom_call.1} parent=1 // pred_check
      _
    $region11: #{tpu_custom_call.1} parent=1 // pred_check_branch
      %98 = sbr.rel (0) target = $region13
    $region12: #{tpu_custom_call.1} parent=1 // pred_region
      %s100 = ssub.s32 512, 512
      %101 = vsyncadd [#allocation4], %s100
      %s103 = sshll.u32 [#allocation5], 4
      %s104 = int_to_ptr.vmem [resolvable:$true] %s103
      %106 = dma.vmem_to_hbm [thread:$0]  %s104, 512, %s1, [#allocation4]
    $region13: #{tpu_custom_call.1} parent=1 // pred_fallthru
      _
    // Predicated region
    $region14: #{tpu_custom_call.1} parent=1 // pred_check
      _
    $region15: #{tpu_custom_call.1} parent=1 // pred_check_branch
      %108 = sbr.rel (0) target = $region17
    $region16: #{tpu_custom_call.1} parent=1 // pred_region
      %109 = dma.done [#allocation4], 512
    $region17: #{tpu_custom_call.1} parent=1 // pred_fallthru
      _
    %110 = vsyncpa [#allocation3], 1
    %111 = vsyncpa [#allocation4], 1

</llo_original>
